<compile_context>
chip_gen: v6e
topology: v6e:2x2x1
jax: 0.10.0
libtpu: 0.0.40
codegen_flags: <defaults>
</compile_context>

<pallas_src>
import jax
import jax.numpy as jnp
from jax.experimental import pallas as pl
from jax.experimental.pallas import tpu as pltpu


def _round_up(x: int, m: int) -> int:
    return ((x + m - 1) // m) * m


def _bone_mlp_kernel(x_ref, w1_ref, b1_ref, w2_ref, b2_ref, o_ref):
    """Fused 2-layer MLP: o = relu(relu(x @ w1.T + b1) @ w2.T + b2).

    Weights are in PyTorch (out, in) layout; we contract on the `in` axis of
    both operands (dot_general), so no transpose / weight copy is materialized.
    The hidden activation `h` never leaves VMEM.
    """
    x = x_ref[...]                       # (bt, Din)  f32
    dn = (((1,), (1,)), ((), ()))        # contract dim 1 of x with dim 1 of W

    h = jax.lax.dot_general(x, w1_ref[...], dn,
                            preferred_element_type=jnp.float32)
    h = jnp.maximum(h + b1_ref[...], 0.0)                       # (bt, N_p)

    y = jax.lax.dot_general(h, w2_ref[...], dn,
                            preferred_element_type=jnp.float32)
    y = jnp.maximum(y + b2_ref[...], 0.0)                       # (bt, Dout)

    o_ref[...] = y.astype(o_ref.dtype)


def prepare_bone_mlp_params(params):
    """Pad the hidden dimension of the weights to 128 lanes ONCE (not per call).

    Layout after padding (zero padding keeps the math exact):
      w1p : (N_p, Din)   b1p : (1, N_p)
      w2p : (Dout, N_p)  b2p : (1, Dout)
    """
    (w1, b1), (w2, b2) = params
    N, Din = w1.shape
    Dout = w2.shape[0]
    N_p = _round_up(N, 128)

    w1p = jnp.zeros((N_p, Din), jnp.float32).at[:N, :].set(w1.astype(jnp.float32))
    b1p = jnp.zeros((1, N_p), jnp.float32).at[:, :N].set(
        b1.astype(jnp.float32).reshape(1, -1))
    w2p = jnp.zeros((Dout, N_p), jnp.float32).at[:, :N].set(w2.astype(jnp.float32))
    b2p = b2.astype(jnp.float32).reshape(1, Dout)
    return (w1p, b1p, w2p, b2p), (Din, N, Dout)


def bone_mlp_forward(bone_feat, padded_params, *, batch_tile=1024):
    """Pallas forward matching BoneMLP.forward (Sequential of 2x Linear+ReLU).

    `padded_params` comes from `prepare_bone_mlp_params` (call it once at init).
    """
    (w1p, b1p, w2p, b2p), (Din, _, Dout) = padded_params
    x = bone_feat.astype(jnp.float32)
    B = x.shape[0]
    N_p = w1p.shape[0]

    # Batch padded only to a sublane multiple of 8 (no tail over-padding).
    B_p = _round_up(max(B, 1), 8)

    # Batch tile: multiple of 8, capped at ceil(B_p/2) so v7x's 2 TensorCores
    # both get work when possible, and shrunk so that bt divides B_p exactly.
    bt = max(8, min(_round_up(batch_tile, 8), B_p))
    bt = min(bt, max(8, _round_up(pl.cdiv(B_p, 2), 8)))
    while B_p % bt != 0:
        bt -= 8

    if B_p != B:
        xp = jnp.zeros((B_p, Din), jnp.float32).at[:B, :].set(x)
    else:
        xp = x

    cost = pl.CostEstimate(
        flops=2 * B_p * (Din * N_p + N_p * Dout),
        transcendentals=0,
        bytes_accessed=4 * (B_p * (Din + Dout)
                            + w1p.size + b1p.size + w2p.size + b2p.size),
    )

    grid = (B_p // bt,)
    out = pl.pallas_call(
        _bone_mlp_kernel,
        out_shape=jax.ShapeDtypeStruct((B_p, Dout), jnp.float32),
        grid=grid,
        in_specs=[
            pl.BlockSpec((bt, Din), lambda i: (i, 0)),     # x tile over batch
            pl.BlockSpec((N_p, Din), lambda i: (0, 0)),    # w1 resident
            pl.BlockSpec((1, N_p), lambda i: (0, 0)),      # b1 resident
            pl.BlockSpec((Dout, N_p), lambda i: (0, 0)),   # w2 resident
            pl.BlockSpec((1, Dout), lambda i: (0, 0)),     # b2 resident
        ],
        out_specs=pl.BlockSpec((bt, Dout), lambda i: (i, 0)),
        compiler_params=pltpu.CompilerParams(
            dimension_semantics=("parallel",)),            # shard batch on v7x 2xTC
        cost_estimate=cost,
    )(xp, w1p, b1p, w2p, b2p)

    return out if B_p == B else out[:B, :]


def init_bone_mlp_params(key, in_features, n_features, bone_feature_dim):
    """nn.Linear-style init: U(-1/sqrt(fan_in), 1/sqrt(fan_in)) for W and b."""
    params = []
    for din, dout in [(in_features, n_features), (n_features, bone_feature_dim)]:
        key, kw, kb = jax.random.split(key, 3)
        bound = 1.0 / float(din) ** 0.5
        w = jax.random.uniform(kw, (dout, din), jnp.float32, -bound, bound)
        b = jax.random.uniform(kb, (dout,), jnp.float32, -bound, bound)
        params.append((w, b))
    return params


def bone_mlp_reference(x, params):
    """Pure-JAX reference of BoneMLP.forward for correctness checking."""
    (w1, b1), (w2, b2) = params
    h = jnp.maximum(x @ w1.T + b1, 0.0)
    return jnp.maximum(h @ w2.T + b2, 0.0)


if __name__ == "__main__":
    key = jax.random.PRNGKey(0)

    # BoneMLP(bone_dim=12, bone_feature_dim=32, parent=-1):
    #   in_features = 12, n_features = 12 + 32 = 44, output dim = 32.
    bone_dim, bone_feature_dim, parent = 12, 32, -1
    in_features = bone_dim if parent == -1 else bone_dim + bone_feature_dim
    n_features = bone_dim + bone_feature_dim

    kx, kp, kx2 = jax.random.split(key, 3)
    params = init_bone_mlp_params(kp, in_features, n_features, bone_feature_dim)
    padded = prepare_bone_mlp_params(params)   # hoisted, done once

    # Small, deterministic example (batch=2).
    B = 2
    bone_feat = jax.random.normal(kx, (B, in_features), jnp.float32)
    out = jax.block_until_ready(bone_mlp_forward(bone_feat, padded))
    assert out.shape == (B, bone_feature_dim)
    ref = bone_mlp_reference(bone_feat, params)
    assert jnp.allclose(out, ref, atol=1e-4, rtol=1e-4)
    assert bool(jnp.all(out >= 0.0))   # output ReLU

    # Extra check exercising grid > 1 plus the batch tail (B not multiple of 8).
    B2 = 300
    bone_feat2 = jax.random.normal(kx2, (B2, in_features), jnp.float32)
    out2 = jax.block_until_ready(
        bone_mlp_forward(bone_feat2, padded, batch_tile=128))
    ref2 = bone_mlp_reference(bone_feat2, params)
    assert out2.shape == (B2, bone_feature_dim)
    assert jnp.allclose(out2, ref2, atol=1e-4, rtol=1e-4)

    print("KERNEL_OK")
</pallas_src>

<mosaic_0001>
module attributes {stable_mosaic.version = 11 : i64} {
  func.func @_bone_mlp_kernel(%arg0: i32, %arg1: memref<8x12xf32, #tpu.memory_space<vmem>>, %arg2: memref<128x12xf32, #tpu.memory_space<vmem>>, %arg3: memref<1x128xf32, #tpu.memory_space<vmem>>, %arg4: memref<32x128xf32, #tpu.memory_space<vmem>>, %arg5: memref<1x32xf32, #tpu.memory_space<vmem>>, %arg6: memref<8x32xf32, #tpu.memory_space<vmem>>) attributes {dimension_semantics = [#tpu.dimension_semantics<parallel>], iteration_bounds = array<i64: 1>, scalar_prefetch = 0 : i64, scratch_operands = 0 : i64, tpu.core_type = #tpu.core_type<tc>, window_params = [{transform_indices = @transform_0, window_bounds = array<i64: 8, 12>}, {pipeline_mode = #tpu.pipeline_mode<synchronous>, transform_indices = @transform_1, window_bounds = array<i64: 128, 12>}, {pipeline_mode = #tpu.pipeline_mode<synchronous>, transform_indices = @transform_2, window_bounds = array<i64: 1, 128>}, {pipeline_mode = #tpu.pipeline_mode<synchronous>, transform_indices = @transform_3, window_bounds = array<i64: 32, 128>}, {pipeline_mode = #tpu.pipeline_mode<synchronous>, transform_indices = @transform_4, window_bounds = array<i64: 1, 32>}, {transform_indices = @transform_5, window_bounds = array<i64: 8, 32>}]} {
    %c0 = arith.constant 0 : index
    %c0_0 = arith.constant 0 : index
    %0 = vector.load %arg1[%c0, %c0_0] : memref<8x12xf32, #tpu.memory_space<vmem>>, vector<8x12xf32>
    %c0_1 = arith.constant 0 : index
    %c0_2 = arith.constant 0 : index
    %1 = vector.load %arg2[%c0_1, %c0_2] : memref<128x12xf32, #tpu.memory_space<vmem>>, vector<128x12xf32>
    %cst = arith.constant dense<0.000000e+00> : vector<8x128xf32>
    %2 = tpu.matmul %0, %1, %cst {dimension_numbers = #tpu.dot_dimension_numbers<[1], [1], [0], [0], [0, 0, 1, 0], [], []>} : vector<8x12xf32>, vector<128x12xf32>, vector<8x128xf32> -> vector<8x128xf32>
    %c0_3 = arith.constant 0 : index
    %c0_4 = arith.constant 0 : index
    %3 = vector.load %arg3[%c0_3, %c0_4] : memref<1x128xf32, #tpu.memory_space<vmem>>, vector<1x128xf32>
    %4 = vector.broadcast %3 : vector<1x128xf32> to vector<8x128xf32>
    %5 = arith.addf %2, %4 : vector<8x128xf32>
    %cst_5 = arith.constant 0.000000e+00 : f32
    %6 = vector.broadcast %cst_5 : f32 to vector<8x128xf32>
    %7 = arith.maximumf %5, %6 : vector<8x128xf32>
    %c0_6 = arith.constant 0 : index
    %c0_7 = arith.constant 0 : index
    %8 = vector.load %arg4[%c0_6, %c0_7] : memref<32x128xf32, #tpu.memory_space<vmem>>, vector<32x128xf32>
    %cst_8 = arith.constant dense<0.000000e+00> : vector<8x32xf32>
    %9 = tpu.matmul %7, %8, %cst_8 {dimension_numbers = #tpu.dot_dimension_numbers<[1], [1], [0], [0], [0, 0, 1, 0], [], []>} : vector<8x128xf32>, vector<32x128xf32>, vector<8x32xf32> -> vector<8x32xf32>
    %c0_9 = arith.constant 0 : index
    %c0_10 = arith.constant 0 : index
    %10 = vector.load %arg5[%c0_9, %c0_10] : memref<1x32xf32, #tpu.memory_space<vmem>>, vector<1x32xf32>
    %11 = vector.broadcast %10 : vector<1x32xf32> to vector<8x32xf32>
    %12 = arith.addf %9, %11 : vector<8x32xf32>
    %cst_11 = arith.constant 0.000000e+00 : f32
    %13 = vector.broadcast %cst_11 : f32 to vector<8x32xf32>
    %14 = arith.maximumf %12, %13 : vector<8x32xf32>
    %c0_12 = arith.constant 0 : index
    %c0_13 = arith.constant 0 : index
    %15 = vector.load %arg6[%c0_12, %c0_13] : memref<8x32xf32, #tpu.memory_space<vmem>>, vector<8x32xf32>
    tpu.vector_store %arg6[%c0_12, %c0_13], %14 {strides = array<i32>} : memref<8x32xf32, #tpu.memory_space<vmem>>, vector<8x32xf32>,
    return
  }
  func.func @transform_0(%arg0: i32) -> (i32, i32) {
    %c0_i32 = arith.constant 0 : i32
    %c0_i32_0 = arith.constant 0 : i32
    return %arg0, %c0_i32 : i32, i32
  }
  func.func @transform_1(%arg0: i32) -> (i32, i32) {
    %c0_i32 = arith.constant 0 : i32
    %c0_i32_0 = arith.constant 0 : i32
    %c0_i32_1 = arith.constant 0 : i32
    return %c0_i32, %c0_i32_0 : i32, i32
  }
  func.func @transform_2(%arg0: i32) -> (i32, i32) {
    %c0_i32 = arith.constant 0 : i32
    %c0_i32_0 = arith.constant 0 : i32
    %c0_i32_1 = arith.constant 0 : i32
    return %c0_i32, %c0_i32_0 : i32, i32
  }
  func.func @transform_3(%arg0: i32) -> (i32, i32) {
    %c0_i32 = arith.constant 0 : i32
    %c0_i32_0 = arith.constant 0 : i32
    %c0_i32_1 = arith.constant 0 : i32
    return %c0_i32, %c0_i32_0 : i32, i32
  }
  func.func @transform_4(%arg0: i32) -> (i32, i32) {
    %c0_i32 = arith.constant 0 : i32
    %c0_i32_0 = arith.constant 0 : i32
    %c0_i32_1 = arith.constant 0 : i32
    return %c0_i32, %c0_i32_0 : i32, i32
  }
  func.func @transform_5(%arg0: i32) -> (i32, i32) {
    %c0_i32 = arith.constant 0 : i32
    %c0_i32_0 = arith.constant 0 : i32
    return %arg0, %c0_i32 : i32, i32
  }
}

</mosaic_0001>

<llo_original>
// kernel: tpu_custom_call.1
$region0: #{tpu_custom_call.1}
  #allocation0 [shape = 'u32[]', space=smem, size = 0x4, offset = 0x4, fixed_abs, tag = 'smem constant byte address 0x4 - core index']
  #allocation1 [shape = 'u32[144,128]{1,0:T(1,128)}', space=vmem, size = 0x12000, scoped, tag = 'internal scratch']
  %s0 = inlined_call_operand.vmem [shape: f32[8,12], index: 0, kind: input, shape index: {}]
  %s1 = inlined_call_operand.vmem [shape: f32[128,12], index: 1, kind: input, shape index: {}]
  %s2 = inlined_call_operand.vmem [shape: f32[1,128], index: 2, kind: input, shape index: {}]
  %s3 = inlined_call_operand.vmem [shape: f32[32,128], index: 3, kind: input, shape index: {}]
  %s4 = inlined_call_operand.vmem [shape: f32[1,32], index: 4, kind: input, shape index: {}]
  %s5 = inlined_call_operand.hbm [shape: f32[8,32], index: 5, kind: output, shape index: {}]
  %s6 = sld [smem:[#allocation0]]
  $region30: #{tpu_custom_call.1} parent=0
    _
  %s8 = ssub.s32 1, %s6
  %s9 = scalar_select 0, %s8, %s6
  $region1: #{tpu_custom_call.1} parent=0
    #allocation2 [shape = 'u8[4096]{0}', space=vmem, size = 0x1000, scoped, tag = 'output window, operand 0, single buffered']
    #allocation3 [shape = 's32[1]{0}', space=sflag, size = 0x4, scoped, tag = 'scoped memory for tpu_custom_call.1']
    %10 = vsyncpa [#allocation3], 0
    // Predicated region
    $region2: #{tpu_custom_call.1} parent=1 // pred_check
      _
    $region3: #{tpu_custom_call.1} parent=1 // pred_check_branch
      %12 = sbr.rel (0) target = $region5
    $region4: #{tpu_custom_call.1} parent=1 // pred_region
      _
    $region5: #{tpu_custom_call.1} parent=1 // pred_fallthru
      _
    // Predicated region
    $region6: #{tpu_custom_call.1} parent=1 // pred_check
      _
    $region7: #{tpu_custom_call.1} parent=1 // pred_check_branch
      %14 = sbr.rel (0) target = $region9
    $region8: #{tpu_custom_call.1} parent=1 // pred_region
      _
    $region9: #{tpu_custom_call.1} parent=1 // pred_fallthru
      _
    // Predicated region
    $region10: #{tpu_custom_call.1} parent=1 // pred_check
      _
    $region11: #{tpu_custom_call.1} parent=1 // pred_check_branch
      %16 = sbr.rel (0) target = $region13
    $region12: #{tpu_custom_call.1} parent=1 // pred_region
      _
    $region13: #{tpu_custom_call.1} parent=1 // pred_fallthru
      _
    // Predicated region
    $region14: #{tpu_custom_call.1} parent=1 // pred_check
      _
    $region15: #{tpu_custom_call.1} parent=1 // pred_check_branch
      %18 = sbr.rel (0) target = $region17
    $region16: #{tpu_custom_call.1} parent=1 // pred_region
      _
    $region17: #{tpu_custom_call.1} parent=1 // pred_fallthru
      _
    // Predicated region
    $region18: #{tpu_custom_call.1} parent=1 // pred_check
      _
    $region19: #{tpu_custom_call.1} parent=1 // pred_check_branch
      %20 = sbr.rel (0) target = $region21
    $region20: #{tpu_custom_call.1} parent=1 // pred_region
      _
    $region21: #{tpu_custom_call.1} parent=1 // pred_fallthru
      _
    %v21 = vld [vmem:[%s0] sm:$0xff]
    %v22 = vld [vmem:[%s1] sm:$0xff]
    %v23 = vld [vmem:[%s1 + $0x8] sm:$0xff]
    %v24 = vld [vmem:[%s1 + $0x10] sm:$0xff]
    %v25 = vld [vmem:[%s1 + $0x18] sm:$0xff]
    %v26 = vld [vmem:[%s1 + $0x20] sm:$0xff]
    %v27 = vld [vmem:[%s1 + $0x28] sm:$0xff]
    %v28 = vld [vmem:[%s1 + $0x30] sm:$0xff]
    %v29 = vld [vmem:[%s1 + $0x38] sm:$0xff]
    %v30 = vld [vmem:[%s1 + $0x40] sm:$0xff]
    %v31 = vld [vmem:[%s1 + $0x48] sm:$0xff]
    %v32 = vld [vmem:[%s1 + $0x50] sm:$0xff]
    %v33 = vld [vmem:[%s1 + $0x58] sm:$0xff]
    %v34 = vld [vmem:[%s1 + $0x60] sm:$0xff]
    %v35 = vld [vmem:[%s1 + $0x68] sm:$0xff]
    %v36 = vld [vmem:[%s1 + $0x70] sm:$0xff]
    %v37 = vld [vmem:[%s1 + $0x78] sm:$0xff]
    %v38 = vld [vmem:[%s2] sm:$0x1]
    %v40 = vlaneseq
    %v41 = vshrl.u32 %v40, 7
    %v42 = vsub.s32 0, %v41
    %v43 = vrot.slane %v38, %v42
    %vm45 = vcmask 97280
    %v47 = vsel %vm45, %v21, 0
    %v50 = vsel %vm45, %v22, 0
    %v53 = vsel %vm45, %v23, 0
    %v56 = vsel %vm45, %v24, 0
    %v59 = vsel %vm45, %v25, 0
    %v62 = vsel %vm45, %v26, 0
    %v65 = vsel %vm45, %v27, 0
    %v68 = vsel %vm45, %v28, 0
    %v71 = vsel %vm45, %v29, 0
    %v74 = vsel %vm45, %v30, 0
    %v77 = vsel %vm45, %v31, 0
    %v80 = vsel %vm45, %v32, 0
    %v83 = vsel %vm45, %v33, 0
    %v86 = vsel %vm45, %v34, 0
    %v89 = vsel %vm45, %v35, 0
    %v92 = vsel %vm45, %v36, 0
    %v95 = vsel %vm45, %v37, 0
    %97 = vmatprep.subr.mxu0 0.0
    %98 = vmatpush1.xpose.msra.mxu0 %v95
    %99 = vmatprep.subr.mxu0 0.0
    %100 = vmatpush1.xpose.msra.mxu0 %v92
    %101 = vmatprep.subr.mxu0 0.0
    %102 = vmatpush1.xpose.msra.mxu0 %v89
    %103 = vmatprep.subr.mxu0 0.0
    %104 = vmatpush1.xpose.msra.mxu0 %v86
    %105 = vmatprep.subr.mxu0 0.0
    %106 = vmatpush1.xpose.msra.mxu0 %v83
    %107 = vmatprep.subr.mxu0 0.0
    %108 = vmatpush1.xpose.msra.mxu0 %v80
    %109 = vmatprep.subr.mxu0 0.0
    %110 = vmatpush1.xpose.msra.mxu0 %v77
    %111 = vmatprep.subr.mxu0 0.0
    %112 = vmatpush1.xpose.msra.mxu0 %v74
    %113 = vmatprep.subr.mxu0 0.0
    %114 = vmatpush1.xpose.msra.mxu0 %v71
    %115 = vmatprep.subr.mxu0 0.0
    %116 = vmatpush1.xpose.msra.mxu0 %v68
    %117 = vmatprep.subr.mxu0 0.0
    %118 = vmatpush1.xpose.msra.mxu0 %v65
    %119 = vmatprep.subr.mxu0 0.0
    %120 = vmatpush1.xpose.msra.mxu0 %v62
    %121 = vmatprep.subr.mxu0 0.0
    %122 = vmatpush1.xpose.msra.mxu0 %v59
    %123 = vmatprep.subr.mxu0 0.0
    %124 = vmatpush1.xpose.msra.mxu0 %v56
    %125 = vmatprep.subr.mxu0 0.0
    %126 = vmatpush1.xpose.msra.mxu0 %v53
    %127 = vmatprep.subr.mxu0 0.0
    %128 = vmatpush1.xpose.msra.mxu0 %v50
    %129 = vmatprep.subr.mxu0 0.0
    %130 = vmatpush2.xpose.msra.mxu0 0.0
    %131 = vmatprep.subr.mxu0 0.0
    %132 = vmatpush2.xpose.msra.mxu0 0.0
    %133 = vmatprep.subr.mxu0 0.0
    %134 = vmatpush2.xpose.msra.mxu0 0.0
    %135 = vmatprep.subr.mxu0 0.0
    %136 = vmatpush2.xpose.msra.mxu0 0.0
    %137 = vmatprep.subr.mxu0 0.0
    %138 = vmatpush2.xpose.msra.mxu0 0.0
    %139 = vmatprep.subr.mxu0 0.0
    %140 = vmatpush2.xpose.msra.mxu0 0.0
    %141 = vmatprep.subr.mxu0 0.0
    %142 = vmatpush2.xpose.msra.mxu0 0.0
    %143 = vmatprep.subr.mxu0 0.0
    %144 = vmatpush2.xpose.msra.mxu0 0.0
    %145 = vmatprep.subr.mxu0 0.0
    %146 = vmatpush2.xpose.msra.mxu0 0.0
    %147 = vmatprep.subr.mxu0 0.0
    %148 = vmatpush2.xpose.msra.mxu0 0.0
    %149 = vmatprep.subr.mxu0 0.0
    %150 = vmatpush2.xpose.msra.mxu0 0.0
    %151 = vmatprep.subr.mxu0 0.0
    %152 = vmatpush2.xpose.msra.mxu0 0.0
    %153 = vmatprep.subr.mxu0 0.0
    %154 = vmatpush2.xpose.msra.mxu0 0.0
    %155 = vmatprep.subr.mxu0 0.0
    %156 = vmatpush2.xpose.msra.mxu0 0.0
    %157 = vmatprep.subr.mxu0 0.0
    %158 = vmatpush2.xpose.msra.mxu0 0.0
    %159 = vmatprep.subr.mxu0 0.0
    %160 = vmatpush2.xpose.msra.mxu0 0.0
    %161 = vmatprep.mubr.f32.mxu0 0.0
    %162 = vmatmul.mubr.f32.gmra.mxu0 %v47
    %v163 = vpop.f32.mrf.mxu0
    %v164 = vadd.f32 %v43, %v163
    %v165 = vpop.f32.mrf.mxu0
    %166 = vdwg.mxu0
    %v167 = vmax.f32 %v164, 0.0
    %v168 = vld [vmem:[%s3] sm:$0xff]
    %v169 = vld [vmem:[%s3 + $0x8] sm:$0xff]
    %v170 = vld [vmem:[%s3 + $0x10] sm:$0xff]
    %v171 = vld [vmem:[%s3 + $0x18] sm:$0xff]
    %v172 = vld [vmem:[%s4] sm:$0x1]
    %v174 = vlaneseq
    %v175 = vshrl.u32 %v174, 7
    %v176 = vsub.s32 0, %v175
    %v177 = vrot.slane %v172, %v176
    %179 = vmatprep.subr.mxu0 0.0
    %180 = vmatpush1.xpose.msra.mxu0 0.0
    %181 = vmatprep.subr.mxu0 0.0
    %182 = vmatpush1.xpose.msra.mxu0 0.0
    %183 = vmatprep.subr.mxu0 0.0
    %184 = vmatpush1.xpose.msra.mxu0 0.0
    %185 = vmatprep.subr.mxu0 0.0
    %186 = vmatpush1.xpose.msra.mxu0 0.0
    %187 = vmatprep.subr.mxu0 0.0
    %188 = vmatpush1.xpose.msra.mxu0 0.0
    %189 = vmatprep.subr.mxu0 0.0
    %190 = vmatpush1.xpose.msra.mxu0 0.0
    %191 = vmatprep.subr.mxu0 0.0
    %192 = vmatpush1.xpose.msra.mxu0 0.0
    %193 = vmatprep.subr.mxu0 0.0
    %194 = vmatpush1.xpose.msra.mxu0 0.0
    %195 = vmatprep.subr.mxu0 0.0
    %196 = vmatpush1.xpose.msra.mxu0 0.0
    %197 = vmatprep.subr.mxu0 0.0
    %198 = vmatpush1.xpose.msra.mxu0 0.0
    %199 = vmatprep.subr.mxu0 0.0
    %200 = vmatpush1.xpose.msra.mxu0 0.0
    %201 = vmatprep.subr.mxu0 0.0
    %202 = vmatpush1.xpose.msra.mxu0 0.0
    %203 = vmatprep.subr.mxu0 0.0
    %204 = vmatpush1.xpose.msra.mxu0 %v171
    %205 = vmatprep.subr.mxu0 0.0
    %206 = vmatpush1.xpose.msra.mxu0 %v170
    %207 = vmatprep.subr.mxu0 0.0
    %208 = vmatpush1.xpose.msra.mxu0 %v169
    %209 = vmatprep.subr.mxu0 0.0
    %210 = vmatpush1.xpose.msra.mxu0 %v168
    %211 = vmatprep.subr.mxu0 0.0
    %212 = vmatpush2.xpose.msra.mxu0 0.0
    %213 = vmatprep.subr.mxu0 0.0
    %214 = vmatpush2.xpose.msra.mxu0 0.0
    %215 = vmatprep.subr.mxu0 0.0
    %216 = vmatpush2.xpose.msra.mxu0 0.0
    %217 = vmatprep.subr.mxu0 0.0
    %218 = vmatpush2.xpose.msra.mxu0 0.0
    %219 = vmatprep.subr.mxu0 0.0
    %220 = vmatpush2.xpose.msra.mxu0 0.0
    %221 = vmatprep.subr.mxu0 0.0
    %222 = vmatpush2.xpose.msra.mxu0 0.0
    %223 = vmatprep.subr.mxu0 0.0
    %224 = vmatpush2.xpose.msra.mxu0 0.0
    %225 = vmatprep.subr.mxu0 0.0
    %226 = vmatpush2.xpose.msra.mxu0 0.0
    %227 = vmatprep.subr.mxu0 0.0
    %228 = vmatpush2.xpose.msra.mxu0 0.0
    %229 = vmatprep.subr.mxu0 0.0
    %230 = vmatpush2.xpose.msra.mxu0 0.0
    %231 = vmatprep.subr.mxu0 0.0
    %232 = vmatpush2.xpose.msra.mxu0 0.0
    %233 = vmatprep.subr.mxu0 0.0
    %234 = vmatpush2.xpose.msra.mxu0 0.0
    %235 = vmatprep.subr.mxu0 0.0
    %236 = vmatpush2.xpose.msra.mxu0 0.0
    %237 = vmatprep.subr.mxu0 0.0
    %238 = vmatpush2.xpose.msra.mxu0 0.0
    %239 = vmatprep.subr.mxu0 0.0
    %240 = vmatpush2.xpose.msra.mxu0 0.0
    %241 = vmatprep.subr.mxu0 0.0
    %242 = vmatpush2.xpose.msra.mxu0 0.0
    %243 = vmatprep.mubr.f32.mxu0 0.0
    %244 = vmatmul.mubr.f32.gmra.mxu0 %v167
    %v245 = vpop.f32.mrf.mxu0
    %v246 = vadd.f32 %v177, %v245
    %v247 = vpop.f32.mrf.mxu0
    %248 = vdwg.mxu0
    %v249 = vmax.f32 %v246, 0.0
    %vm250 = vcmask 261120
    %251 = vst.msk [vmem:[#allocation2] sm:$0xff] %vm250, %v249
    // Predicated region
    $region22: #{tpu_custom_call.1} parent=1 // pred_check
      _
    $region23: #{tpu_custom_call.1} parent=1 // pred_check_branch
      %253 = sbr.rel (0) target = $region25
    $region24: #{tpu_custom_call.1} parent=1 // pred_region
      %s255 = ssub.s32 128, 128
      %256 = vsyncadd [#allocation3], %s255
      %s258 = sshll.u32 [#allocation2], 4
      %s259 = int_to_ptr.vmem [resolvable:$true] %s258
      %261 = dma.vmem_to_hbm [thread:$0]  %s259, 128, %s5, [#allocation3]
    $region25: #{tpu_custom_call.1} parent=1 // pred_fallthru
      _
    // Predicated region
    $region26: #{tpu_custom_call.1} parent=1 // pred_check
      _
    $region27: #{tpu_custom_call.1} parent=1 // pred_check_branch
      %263 = sbr.rel (0) target = $region29
    $region28: #{tpu_custom_call.1} parent=1 // pred_region
      %264 = dma.done [#allocation3], 128
    $region29: #{tpu_custom_call.1} parent=1 // pred_fallthru
      _
    %265 = vsyncpa [#allocation3], 1

</llo_original>
